<compile_context>
chip_gen: v5e
topology: v5e:2x2
jax: 0.10.0
libtpu: 0.0.40
codegen_flags: <defaults>
</compile_context>

<pallas_src>
import functools
import math

import jax
import jax.numpy as jnp
from jax.experimental import pallas as pl
from jax.experimental.pallas import tpu as pltpu

_LANE = 128          # TPU lane width: last dim of every operand padded to this
_NEG_BIG = -1e30     # masked-out pad logits (finite to avoid inf arithmetic)


def _round_up(a: int, b: int) -> int:
    return (a + b - 1) // b * b


def actor_mlp_kernel(x_ref, w1_ref, b1_ref, w2_ref, b2_ref, w3_ref, b3_ref,
                     o_ref, *, action_size: int):
    x = x_ref[...]                       # (TB, IN_pad) f32
    b1 = b1_ref[0, :]                    # read once, broadcast on the value
    b2 = b2_ref[0, :]
    b3 = b3_ref[0, :]

    # fc1 + ReLU (MXU matmul, f32 accumulate)
    h1 = jnp.dot(x, w1_ref[...], preferred_element_type=jnp.float32) + b1
    h1 = jnp.maximum(h1, 0.0)

    # fc2 + ReLU
    h2 = jnp.dot(h1, w2_ref[...], preferred_element_type=jnp.float32) + b2
    h2 = jnp.maximum(h2, 0.0)

    # fc3
    logits = jnp.dot(h2, w3_ref[...], preferred_element_type=jnp.float32) + b3

    # Mask the lane-padding columns so they do not perturb the softmax.
    col = jax.lax.broadcasted_iota(jnp.int32, logits.shape, 1)
    logits = jnp.where(col < action_size, logits, _NEG_BIG)

    # Numerically stable log_softmax over the last (action) axis.
    m = jnp.max(logits, axis=-1, keepdims=True)
    shifted = logits - m
    lse = jnp.log(jnp.sum(jnp.exp(shifted), axis=-1, keepdims=True))
    o_ref[...] = shifted - lse           # lane-dense (TB, ACT_pad) store


def actor_network_forward(x, params, *, block_batch=None):
    """x: (B, input_size) f32; params: dict of pre-transposed weights/biases."""
    w1, b1, w2, b2, w3, b3 = (params["w1"], params["b1"], params["w2"],
                              params["b2"], params["w3"], params["b3"])
    B, IN = x.shape
    HID = w1.shape[1]
    ACT = w3.shape[1]

    # Lane-friendly padded dims (multiples of 128 on the lane axis).
    IN_p = _round_up(IN, _LANE)
    HID_p = _round_up(HID, _LANE)
    ACT_p = _round_up(ACT, _LANE)

    # Batch tile: multiple of 8 sublanes; cap so per-step buffers stay tiny
    # relative to VMEM even on v7x (64 MiB physical / 32 MiB scoped default).
    if block_batch is None:
        block_batch = min(512, _round_up(B, 8))
    TB = _round_up(block_batch, 8)
    B_p = _round_up(B, TB)

    f32 = jnp.float32
    x_p = jnp.pad(x.astype(f32), ((0, B_p - B), (0, IN_p - IN)))
    w1_p = jnp.pad(w1, ((0, IN_p - IN), (0, HID_p - HID)))
    b1_p = jnp.pad(b1, ((0, 0), (0, HID_p - HID)))
    w2_p = jnp.pad(w2, ((0, HID_p - HID), (0, HID_p - HID)))
    b2_p = jnp.pad(b2, ((0, 0), (0, HID_p - HID)))
    w3_p = jnp.pad(w3, ((0, HID_p - HID), (0, ACT_p - ACT)))
    b3_p = jnp.pad(b3, ((0, 0), (0, ACT_p - ACT)))

    grid = (B_p // TB,)
    kernel = functools.partial(actor_mlp_kernel, action_size=ACT)

    flops = 2 * B * (IN * HID + HID * HID + HID * ACT)
    transcendentals = B * ACT  # exp in the softmax (log is per-row, negligible)
    bytes_accessed = 4 * (B * IN + B * ACT
                          + IN * HID + HID + HID * HID + HID + HID * ACT + ACT)

    out_p = pl.pallas_call(
        kernel,
        out_shape=jax.ShapeDtypeStruct((B_p, ACT_p), jnp.float32),
        grid=grid,
        in_specs=[
            pl.BlockSpec((TB, IN_p), lambda i: (i, 0)),      # x: tiled on batch
            pl.BlockSpec((IN_p, HID_p), lambda i: (0, 0)),   # weights/biases:
            pl.BlockSpec((1, HID_p), lambda i: (0, 0)),      # constant index_map
            pl.BlockSpec((HID_p, HID_p), lambda i: (0, 0)),  # -> VMEM-resident
            pl.BlockSpec((1, HID_p), lambda i: (0, 0)),
            pl.BlockSpec((HID_p, ACT_p), lambda i: (0, 0)),
            pl.BlockSpec((1, ACT_p), lambda i: (0, 0)),
        ],
        out_specs=pl.BlockSpec((TB, ACT_p), lambda i: (i, 0)),
        compiler_params=pltpu.CompilerParams(
            dimension_semantics=("parallel",),  # rows independent: megacore OK
        ),
        cost_estimate=pl.CostEstimate(
            flops=flops,
            transcendentals=transcendentals,
            bytes_accessed=bytes_accessed,
        ),
    )(x_p, w1_p, b1_p, w2_p, b2_p, w3_p, b3_p)

    # Strip batch and lane padding outside the kernel.
    return out_p[:B, :ACT]


def init_linear_params(key, in_features, out_features):
    """Mirror torch.nn.Linear default init (uniform +-1/sqrt(fan_in)).
    Weight returned pre-transposed as (in_features, out_features)."""
    kw, kb = jax.random.split(key)
    bound = 1.0 / math.sqrt(in_features)
    w = jax.random.uniform(kw, (in_features, out_features), jnp.float32,
                           minval=-bound, maxval=bound)
    b = jax.random.uniform(kb, (1, out_features), jnp.float32,
                           minval=-bound, maxval=bound)
    return w, b


def init_actor_params(key, input_size, hidden_size, action_size):
    k1, k2, k3 = jax.random.split(key, 3)
    w1, b1 = init_linear_params(k1, input_size, hidden_size)
    w2, b2 = init_linear_params(k2, hidden_size, hidden_size)
    w3, b3 = init_linear_params(k3, hidden_size, action_size)
    return {"w1": w1, "b1": b1, "w2": w2, "b2": b2, "w3": w3, "b3": b3}


if __name__ == "__main__":
    input_size, hidden_size, action_size = 16, 32, 8
    batch = 8

    key = jax.random.PRNGKey(0)
    k_params, k_x = jax.random.split(key)
    params = init_actor_params(k_params, input_size, hidden_size, action_size)
    x = jax.random.normal(k_x, (batch, input_size), jnp.float32)

    out = actor_network_forward(x, params)
    out = jax.block_until_ready(out)

    # Pure-JAX reference check of the same forward pass (unpadded math).
    h1 = jnp.maximum(x @ params["w1"] + params["b1"], 0.0)
    h2 = jnp.maximum(h1 @ params["w2"] + params["b2"], 0.0)
    logits = h2 @ params["w3"] + params["b3"]
    ref = jax.nn.log_softmax(logits, axis=-1)
    assert out.shape == (batch, action_size)
    assert jnp.allclose(out, ref, atol=1e-5), "mismatch vs reference"

    print("KERNEL_OK")
</pallas_src>

<mosaic_0001>
module attributes {stable_mosaic.version = 11 : i64} {
  func.func @actor_mlp_kernel(%arg0: i32, %arg1: memref<8x128xf32, #tpu.memory_space<vmem>>, %arg2: memref<128x128xf32, #tpu.memory_space<vmem>>, %arg3: memref<1x128xf32, #tpu.memory_space<vmem>>, %arg4: memref<128x128xf32, #tpu.memory_space<vmem>>, %arg5: memref<1x128xf32, #tpu.memory_space<vmem>>, %arg6: memref<128x128xf32, #tpu.memory_space<vmem>>, %arg7: memref<1x128xf32, #tpu.memory_space<vmem>>, %arg8: memref<8x128xf32, #tpu.memory_space<vmem>>) attributes {dimension_semantics = [#tpu.dimension_semantics<parallel>], iteration_bounds = array<i64: 1>, scalar_prefetch = 0 : i64, scratch_operands = 0 : i64, tpu.core_type = #tpu.core_type<tc>, window_params = [{transform_indices = @transform_0, window_bounds = array<i64: 8, 128>}, {pipeline_mode = #tpu.pipeline_mode<synchronous>, transform_indices = @transform_1, window_bounds = array<i64: 128, 128>}, {pipeline_mode = #tpu.pipeline_mode<synchronous>, transform_indices = @transform_2, window_bounds = array<i64: 1, 128>}, {pipeline_mode = #tpu.pipeline_mode<synchronous>, transform_indices = @transform_3, window_bounds = array<i64: 128, 128>}, {pipeline_mode = #tpu.pipeline_mode<synchronous>, transform_indices = @transform_4, window_bounds = array<i64: 1, 128>}, {pipeline_mode = #tpu.pipeline_mode<synchronous>, transform_indices = @transform_5, window_bounds = array<i64: 128, 128>}, {pipeline_mode = #tpu.pipeline_mode<synchronous>, transform_indices = @transform_6, window_bounds = array<i64: 1, 128>}, {transform_indices = @transform_7, window_bounds = array<i64: 8, 128>}]} {
    %c0 = arith.constant 0 : index
    %c0_0 = arith.constant 0 : index
    %0 = vector.load %arg1[%c0, %c0_0] : memref<8x128xf32, #tpu.memory_space<vmem>>, vector<8x128xf32>
    %c0_1 = arith.constant 0 : index
    %c0_2 = arith.constant 0 : index
    %1 = vector.load %arg3[%c0_1, %c0_2] : memref<1x128xf32, #tpu.memory_space<vmem>>, vector<1x128xf32>
    %2 = vector.shape_cast %1 : vector<1x128xf32> to vector<128xf32>
    %c0_3 = arith.constant 0 : index
    %c0_4 = arith.constant 0 : index
    %3 = vector.load %arg5[%c0_3, %c0_4] : memref<1x128xf32, #tpu.memory_space<vmem>>, vector<1x128xf32>
    %4 = vector.shape_cast %3 : vector<1x128xf32> to vector<128xf32>
    %c0_5 = arith.constant 0 : index
    %c0_6 = arith.constant 0 : index
    %5 = vector.load %arg7[%c0_5, %c0_6] : memref<1x128xf32, #tpu.memory_space<vmem>>, vector<1x128xf32>
    %6 = vector.shape_cast %5 : vector<1x128xf32> to vector<128xf32>
    %c0_7 = arith.constant 0 : index
    %c0_8 = arith.constant 0 : index
    %7 = vector.load %arg2[%c0_7, %c0_8] : memref<128x128xf32, #tpu.memory_space<vmem>>, vector<128x128xf32>
    %cst = arith.constant dense<0.000000e+00> : vector<8x128xf32>
    %8 = tpu.matmul %0, %7, %cst {dimension_numbers = #tpu.dot_dimension_numbers<[1], [0], [0], [1], [0, 0, 1, 1], [], []>} : vector<8x128xf32>, vector<128x128xf32>, vector<8x128xf32> -> vector<8x128xf32>
    %9 = vector.shape_cast %2 : vector<128xf32> to vector<1x128xf32>
    %10 = vector.broadcast %9 : vector<1x128xf32> to vector<8x128xf32>
    %11 = arith.addf %8, %10 : vector<8x128xf32>
    %cst_9 = arith.constant 0.000000e+00 : f32
    %12 = vector.broadcast %cst_9 : f32 to vector<8x128xf32>
    %13 = arith.maximumf %11, %12 : vector<8x128xf32>
    %c0_10 = arith.constant 0 : index
    %c0_11 = arith.constant 0 : index
    %14 = vector.load %arg4[%c0_10, %c0_11] : memref<128x128xf32, #tpu.memory_space<vmem>>, vector<128x128xf32>
    %cst_12 = arith.constant dense<0.000000e+00> : vector<8x128xf32>
    %15 = tpu.matmul %13, %14, %cst_12 {dimension_numbers = #tpu.dot_dimension_numbers<[1], [0], [0], [1], [0, 0, 1, 1], [], []>} : vector<8x128xf32>, vector<128x128xf32>, vector<8x128xf32> -> vector<8x128xf32>
    %16 = vector.shape_cast %4 : vector<128xf32> to vector<1x128xf32>
    %17 = vector.broadcast %16 : vector<1x128xf32> to vector<8x128xf32>
    %18 = arith.addf %15, %17 : vector<8x128xf32>
    %cst_13 = arith.constant 0.000000e+00 : f32
    %19 = vector.broadcast %cst_13 : f32 to vector<8x128xf32>
    %20 = arith.maximumf %18, %19 : vector<8x128xf32>
    %c0_14 = arith.constant 0 : index
    %c0_15 = arith.constant 0 : index
    %21 = vector.load %arg6[%c0_14, %c0_15] : memref<128x128xf32, #tpu.memory_space<vmem>>, vector<128x128xf32>
    %cst_16 = arith.constant dense<0.000000e+00> : vector<8x128xf32>
    %22 = tpu.matmul %20, %21, %cst_16 {dimension_numbers = #tpu.dot_dimension_numbers<[1], [0], [0], [1], [0, 0, 1, 1], [], []>} : vector<8x128xf32>, vector<128x128xf32>, vector<8x128xf32> -> vector<8x128xf32>
    %23 = vector.shape_cast %6 : vector<128xf32> to vector<1x128xf32>
    %24 = vector.broadcast %23 : vector<1x128xf32> to vector<8x128xf32>
    %25 = arith.addf %22, %24 : vector<8x128xf32>
    %26 = tpu.iota {dimensions = array<i32: 1>} : vector<8x128xi32>
    %c8_i32 = arith.constant 8 : i32
    %27 = vector.broadcast %c8_i32 : i32 to vector<8x128xi32>
    %28 = arith.cmpi slt, %26, %27 : vector<8x128xi32>
    %cst_17 = arith.constant -1.000000e+30 : f32
    %29 = vector.broadcast %cst_17 : f32 to vector<8x128xf32>
    %30 = arith.select %28, %25, %29 : vector<8x128xi1>, vector<8x128xf32>
    %cst_18 = arith.constant dense<0xFF800000> : vector<8xf32>
    %31 = vector.multi_reduction <maximumf>, %30, %cst_18 [1] : vector<8x128xf32> to vector<8xf32>
    %32 = vector.shape_cast %31 : vector<8xf32> to vector<8x1xf32>
    %33 = vector.broadcast %32 : vector<8x1xf32> to vector<8x128xf32>
    %34 = arith.subf %30, %33 : vector<8x128xf32>
    %35 = math.exp %34 : vector<8x128xf32>
    %cst_19 = arith.constant dense<0.000000e+00> : vector<8xf32>
    %36 = vector.multi_reduction <add>, %35, %cst_19 [1] : vector<8x128xf32> to vector<8xf32>
    %37 = vector.shape_cast %36 : vector<8xf32> to vector<8x1xf32>
    %38 = math.log %37 : vector<8x1xf32>
    %39 = vector.broadcast %38 : vector<8x1xf32> to vector<8x128xf32>
    %40 = arith.subf %34, %39 : vector<8x128xf32>
    %c0_20 = arith.constant 0 : index
    %c0_21 = arith.constant 0 : index
    %41 = vector.load %arg8[%c0_20, %c0_21] : memref<8x128xf32, #tpu.memory_space<vmem>>, vector<8x128xf32>
    tpu.vector_store %arg8[%c0_20, %c0_21], %40 {strides = array<i32>} : memref<8x128xf32, #tpu.memory_space<vmem>>, vector<8x128xf32>,
    return
  }
  func.func @transform_0(%arg0: i32) -> (i32, i32) {
    %c0_i32 = arith.constant 0 : i32
    %c0_i32_0 = arith.constant 0 : i32
    return %arg0, %c0_i32 : i32, i32
  }
  func.func @transform_1(%arg0: i32) -> (i32, i32) {
    %c0_i32 = arith.constant 0 : i32
    %c0_i32_0 = arith.constant 0 : i32
    %c0_i32_1 = arith.constant 0 : i32
    return %c0_i32, %c0_i32_0 : i32, i32
  }
  func.func @transform_2(%arg0: i32) -> (i32, i32) {
    %c0_i32 = arith.constant 0 : i32
    %c0_i32_0 = arith.constant 0 : i32
    %c0_i32_1 = arith.constant 0 : i32
    return %c0_i32, %c0_i32_0 : i32, i32
  }
  func.func @transform_3(%arg0: i32) -> (i32, i32) {
    %c0_i32 = arith.constant 0 : i32
    %c0_i32_0 = arith.constant 0 : i32
    %c0_i32_1 = arith.constant 0 : i32
    return %c0_i32, %c0_i32_0 : i32, i32
  }
  func.func @transform_4(%arg0: i32) -> (i32, i32) {
    %c0_i32 = arith.constant 0 : i32
    %c0_i32_0 = arith.constant 0 : i32
    %c0_i32_1 = arith.constant 0 : i32
    return %c0_i32, %c0_i32_0 : i32, i32
  }
  func.func @transform_5(%arg0: i32) -> (i32, i32) {
    %c0_i32 = arith.constant 0 : i32
    %c0_i32_0 = arith.constant 0 : i32
    %c0_i32_1 = arith.constant 0 : i32
    return %c0_i32, %c0_i32_0 : i32, i32
  }
  func.func @transform_6(%arg0: i32) -> (i32, i32) {
    %c0_i32 = arith.constant 0 : i32
    %c0_i32_0 = arith.constant 0 : i32
    %c0_i32_1 = arith.constant 0 : i32
    return %c0_i32, %c0_i32_0 : i32, i32
  }
  func.func @transform_7(%arg0: i32) -> (i32, i32) {
    %c0_i32 = arith.constant 0 : i32
    %c0_i32_0 = arith.constant 0 : i32
    return %arg0, %c0_i32 : i32, i32
  }
}

</mosaic_0001>

<llo_original>
// kernel: tpu_custom_call.1
$region0: #{tpu_custom_call.1}
  #allocation0 [shape = 'u32[]', space=smem, size = 0x4, offset = 0x4, fixed_abs, tag = 'smem constant byte address 0x4 - core index']
  #allocation1 [shape = 'u32[72,128]{1,0:T(1,128)}', space=vmem, size = 0x9000, scoped, tag = 'internal scratch']
  %s0 = inlined_call_operand.hbm [shape: f32[8,128], index: 0, kind: input, shape index: {}]
  %s1 = inlined_call_operand.hbm [shape: f32[128,128], index: 1, kind: input, shape index: {}]
  %s2 = inlined_call_operand.vmem [shape: f32[1,128], index: 2, kind: input, shape index: {}]
  %s3 = inlined_call_operand.hbm [shape: f32[128,128], index: 3, kind: input, shape index: {}]
  %s4 = inlined_call_operand.vmem [shape: f32[1,128], index: 4, kind: input, shape index: {}]
  %s5 = inlined_call_operand.hbm [shape: f32[128,128], index: 5, kind: input, shape index: {}]
  %s6 = inlined_call_operand.vmem [shape: f32[1,128], index: 6, kind: input, shape index: {}]
  %s7 = inlined_call_operand.hbm [shape: f32[8,128], index: 7, kind: output, shape index: {}]
  %s8 = sld [smem:[#allocation0]]
  $region54: #{tpu_custom_call.1} parent=0
    _
  %s10 = ssub.s32 1, %s8
  %s11 = scalar_select 0, %s10, %s8
  $region1: #{tpu_custom_call.1} parent=0
    #allocation2 [shape = 'u8[4096]{0}', space=vmem, size = 0x1000, scoped, tag = 'input window, operand 0, single buffered']
    #allocation3 [shape = 's32[1]{0}', space=sflag, size = 0x4, scoped, tag = 'scoped memory for tpu_custom_call.1']
    #allocation4 [shape = 's32[1]{0}', space=sflag, size = 0x4, scoped, tag = 'scoped memory for tpu_custom_call.1']
    #allocation5 [shape = 'u8[65536]{0}', space=vmem, size = 0x10000, scoped, tag = 'input window, operand 1, single buffered']
    #allocation6 [shape = 's32[1]{0}', space=sflag, size = 0x4, scoped, tag = 'scoped memory for tpu_custom_call.1']
    #allocation7 [shape = 'u8[65536]{0}', space=vmem, size = 0x10000, scoped, tag = 'input window, operand 3, single buffered']
    #allocation8 [shape = 'u8[65536]{0}', space=vmem, size = 0x10000, scoped, tag = 'input window, operand 5, single buffered']
    #allocation9 [shape = 's32[1]{0}', space=sflag, size = 0x4, scoped, tag = 'scoped memory for tpu_custom_call.1']
    #allocation10 [shape = 'u8[4096]{0}', space=vmem, size = 0x1000, scoped, tag = 'output window, operand 0, single buffered']
    %12 = vsyncpa [#allocation3], 0
    %13 = vsyncpa [#allocation6], 0
    %14 = vsyncpa [#allocation9], 0
    %15 = vsyncpa [#allocation4], 0
    // Predicated region
    $region2: #{tpu_custom_call.1} parent=1 // pred_check
      _
    $region3: #{tpu_custom_call.1} parent=1 // pred_check_branch
      %17 = sbr.rel (0) target = $region5
    $region4: #{tpu_custom_call.1} parent=1 // pred_region
      %19 = vsyncadd [#allocation3], 0
      %s21 = sshll.u32 %s0, 4
      %s22 = int_to_ptr.hbm [resolvable:$true] %s21
      %s23 = sshll.u32 [#allocation2], 4
      %s24 = int_to_ptr.vmem [resolvable:$true] %s23
      %26 = dma.hbm_to_vmem [thread:$0]  %s22, 128, %s24, [#allocation3]
    $region5: #{tpu_custom_call.1} parent=1 // pred_fallthru
      _
    // Predicated region
    $region6: #{tpu_custom_call.1} parent=1 // pred_check
      _
    $region7: #{tpu_custom_call.1} parent=1 // pred_check_branch
      %28 = sbr.rel (0) target = $region9
    $region8: #{tpu_custom_call.1} parent=1 // pred_region
      %30 = vsyncadd [#allocation6], 0
      %s31 = sshll.u32 %s1, 4
      %s32 = int_to_ptr.hbm [resolvable:$true] %s31
      %s33 = sshll.u32 [#allocation5], 4
      %s34 = int_to_ptr.vmem [resolvable:$true] %s33
      %39 = dma.hbm_to_vmem [thread:$0]  %s32, 2048, %s34, [#allocation6], 128, 128, 8
    $region9: #{tpu_custom_call.1} parent=1 // pred_fallthru
      _
    // Predicated region
    $region10: #{tpu_custom_call.1} parent=1 // pred_check
      _
    $region11: #{tpu_custom_call.1} parent=1 // pred_check_branch
      %41 = sbr.rel (0) target = $region13
    $region12: #{tpu_custom_call.1} parent=1 // pred_region
      _
    $region13: #{tpu_custom_call.1} parent=1 // pred_fallthru
      _
    // Predicated region
    $region14: #{tpu_custom_call.1} parent=1 // pred_check
      _
    $region15: #{tpu_custom_call.1} parent=1 // pred_check_branch
      %43 = sbr.rel (0) target = $region17
    $region16: #{tpu_custom_call.1} parent=1 // pred_region
      %45 = vsyncadd [#allocation6], 0
      %s46 = sshll.u32 %s3, 4
      %s47 = int_to_ptr.hbm [resolvable:$true] %s46
      %s48 = sshll.u32 [#allocation7], 4
      %s49 = int_to_ptr.vmem [resolvable:$true] %s48
      %54 = dma.hbm_to_vmem [thread:$0]  %s47, 2048, %s49, [#allocation6], 128, 128, 8
    $region17: #{tpu_custom_call.1} parent=1 // pred_fallthru
      _
    // Predicated region
    $region18: #{tpu_custom_call.1} parent=1 // pred_check
      _
    $region19: #{tpu_custom_call.1} parent=1 // pred_check_branch
      %56 = sbr.rel (0) target = $region21
    $region20: #{tpu_custom_call.1} parent=1 // pred_region
      _
    $region21: #{tpu_custom_call.1} parent=1 // pred_fallthru
      _
    // Predicated region
    $region22: #{tpu_custom_call.1} parent=1 // pred_check
      _
    $region23: #{tpu_custom_call.1} parent=1 // pred_check_branch
      %58 = sbr.rel (0) target = $region25
    $region24: #{tpu_custom_call.1} parent=1 // pred_region
      %60 = vsyncadd [#allocation9], 0
      %s61 = sshll.u32 %s5, 4
      %s62 = int_to_ptr.hbm [resolvable:$true] %s61
      %s63 = sshll.u32 [#allocation8], 4
      %s64 = int_to_ptr.vmem [resolvable:$true] %s63
      %69 = dma.hbm_to_vmem [thread:$0]  %s62, 2048, %s64, [#allocation9], 128, 128, 8
    $region25: #{tpu_custom_call.1} parent=1 // pred_fallthru
      _
    // Predicated region
    $region26: #{tpu_custom_call.1} parent=1 // pred_check
      _
    $region27: #{tpu_custom_call.1} parent=1 // pred_check_branch
      %71 = sbr.rel (0) target = $region29
    $region28: #{tpu_custom_call.1} parent=1 // pred_region
      _
    $region29: #{tpu_custom_call.1} parent=1 // pred_fallthru
      _
    // Predicated region
    $region30: #{tpu_custom_call.1} parent=1 // pred_check
      _
    $region31: #{tpu_custom_call.1} parent=1 // pred_check_branch
      %73 = sbr.rel (0) target = $region33
    $region32: #{tpu_custom_call.1} parent=1 // pred_region
      %75 = dma.done [#allocation3], 128
    $region33: #{tpu_custom_call.1} parent=1 // pred_fallthru
      _
    // Predicated region
    $region34: #{tpu_custom_call.1} parent=1 // pred_check
      _
    $region35: #{tpu_custom_call.1} parent=1 // pred_check_branch
      %77 = sbr.rel (0) target = $region37
    $region36: #{tpu_custom_call.1} parent=1 // pred_region
      %79 = dma.done [#allocation6], 2048
    $region37: #{tpu_custom_call.1} parent=1 // pred_fallthru
      _
    // Predicated region
    $region38: #{tpu_custom_call.1} parent=1 // pred_check
      _
    $region39: #{tpu_custom_call.1} parent=1 // pred_check_branch
      %81 = sbr.rel (0) target = $region41
    $region40: #{tpu_custom_call.1} parent=1 // pred_region
      %83 = dma.done [#allocation6], 2048
    $region41: #{tpu_custom_call.1} parent=1 // pred_fallthru
      _
    // Predicated region
    $region42: #{tpu_custom_call.1} parent=1 // pred_check
      _
    $region43: #{tpu_custom_call.1} parent=1 // pred_check_branch
      %85 = sbr.rel (0) target = $region45
    $region44: #{tpu_custom_call.1} parent=1 // pred_region
      %87 = dma.done [#allocation9], 2048
    $region45: #{tpu_custom_call.1} parent=1 // pred_fallthru
      _
    %v88 = vld [vmem:[#allocation2] sm:$0xff]
    %v89 = vld [vmem:[%s2] sm:$0x1]
    %v90 = vld [vmem:[%s4] sm:$0x1]
    %v91 = vld [vmem:[%s6] sm:$0x1]
    %v92 = vld [vmem:[#allocation5] sm:$0xff]
    %v93 = vld [vmem:[#allocation5 + $0x8] sm:$0xff]
    %v94 = vld [vmem:[#allocation5 + $0x10] sm:$0xff]
    %v95 = vld [vmem:[#allocation5 + $0x18] sm:$0xff]
    %v96 = vld [vmem:[#allocation5 + $0x20] sm:$0xff]
    %v97 = vld [vmem:[#allocation5 + $0x28] sm:$0xff]
    %v98 = vld [vmem:[#allocation5 + $0x30] sm:$0xff]
    %v99 = vld [vmem:[#allocation5 + $0x38] sm:$0xff]
    %v100 = vld [vmem:[#allocation5 + $0x40] sm:$0xff]
    %v101 = vld [vmem:[#allocation5 + $0x48] sm:$0xff]
    %v102 = vld [vmem:[#allocation5 + $0x50] sm:$0xff]
    %v103 = vld [vmem:[#allocation5 + $0x58] sm:$0xff]
    %v104 = vld [vmem:[#allocation5 + $0x60] sm:$0xff]
    %v105 = vld [vmem:[#allocation5 + $0x68] sm:$0xff]
    %v106 = vld [vmem:[#allocation5 + $0x70] sm:$0xff]
    %v107 = vld [vmem:[#allocation5 + $0x78] sm:$0xff]
    %v109 = vperm.slane %v89, 0
    %111 = vmatpush.msra.mxu0 %v107
    %112 = vmatpush.msra.mxu0 %v106
    %113 = vmatpush.msra.mxu0 %v105
    %114 = vmatpush.msra.mxu0 %v104
    %115 = vmatpush.msra.mxu0 %v103
    %116 = vmatpush.msra.mxu0 %v102
    %117 = vmatpush.msra.mxu0 %v101
    %118 = vmatpush.msra.mxu0 %v100
    %119 = vmatpush.msra.mxu0 %v99
    %120 = vmatpush.msra.mxu0 %v98
    %121 = vmatpush.msra.mxu0 %v97
    %122 = vmatpush.msra.mxu0 %v96
    %123 = vmatpush.msra.mxu0 %v95
    %124 = vmatpush.msra.mxu0 %v94
    %125 = vmatpush.msra.mxu0 %v93
    %126 = vmatpush.msra.mxu0 %v92
    %127 = vmatmul.f32.gmra.mxu0 %v88
    %v128 = vpop.f32.mrf.mxu0
    %v129 = vadd.f32 %v109, %v128
    %130 = vdwg.mxu0
    %v131 = vmax.f32 %v129, 0.0
    %v132 = vld [vmem:[#allocation7] sm:$0xff]
    %v133 = vld [vmem:[#allocation7 + $0x8] sm:$0xff]
    %v134 = vld [vmem:[#allocation7 + $0x10] sm:$0xff]
    %v135 = vld [vmem:[#allocation7 + $0x18] sm:$0xff]
    %v136 = vld [vmem:[#allocation7 + $0x20] sm:$0xff]
    %v137 = vld [vmem:[#allocation7 + $0x28] sm:$0xff]
    %v138 = vld [vmem:[#allocation7 + $0x30] sm:$0xff]
    %v139 = vld [vmem:[#allocation7 + $0x38] sm:$0xff]
    %v140 = vld [vmem:[#allocation7 + $0x40] sm:$0xff]
    %v141 = vld [vmem:[#allocation7 + $0x48] sm:$0xff]
    %v142 = vld [vmem:[#allocation7 + $0x50] sm:$0xff]
    %v143 = vld [vmem:[#allocation7 + $0x58] sm:$0xff]
    %v144 = vld [vmem:[#allocation7 + $0x60] sm:$0xff]
    %v145 = vld [vmem:[#allocation7 + $0x68] sm:$0xff]
    %v146 = vld [vmem:[#allocation7 + $0x70] sm:$0xff]
    %v147 = vld [vmem:[#allocation7 + $0x78] sm:$0xff]
    %v149 = vperm.slane %v90, 0
    %151 = vmatpush.msra.mxu0 %v147
    %152 = vmatpush.msra.mxu0 %v146
    %153 = vmatpush.msra.mxu0 %v145
    %154 = vmatpush.msra.mxu0 %v144
    %155 = vmatpush.msra.mxu0 %v143
    %156 = vmatpush.msra.mxu0 %v142
    %157 = vmatpush.msra.mxu0 %v141
    %158 = vmatpush.msra.mxu0 %v140
    %159 = vmatpush.msra.mxu0 %v139
    %160 = vmatpush.msra.mxu0 %v138
    %161 = vmatpush.msra.mxu0 %v137
    %162 = vmatpush.msra.mxu0 %v136
    %163 = vmatpush.msra.mxu0 %v135
    %164 = vmatpush.msra.mxu0 %v134
    %165 = vmatpush.msra.mxu0 %v133
    %166 = vmatpush.msra.mxu0 %v132
    %167 = vmatmul.f32.gmra.mxu0 %v131
    %v168 = vpop.f32.mrf.mxu0
    %v169 = vadd.f32 %v149, %v168
    %170 = vdwg.mxu0
    %v171 = vmax.f32 %v169, 0.0
    %v172 = vld [vmem:[#allocation8] sm:$0xff]
    %v173 = vld [vmem:[#allocation8 + $0x8] sm:$0xff]
    %v174 = vld [vmem:[#allocation8 + $0x10] sm:$0xff]
    %v175 = vld [vmem:[#allocation8 + $0x18] sm:$0xff]
    %v176 = vld [vmem:[#allocation8 + $0x20] sm:$0xff]
    %v177 = vld [vmem:[#allocation8 + $0x28] sm:$0xff]
    %v178 = vld [vmem:[#allocation8 + $0x30] sm:$0xff]
    %v179 = vld [vmem:[#allocation8 + $0x38] sm:$0xff]
    %v180 = vld [vmem:[#allocation8 + $0x40] sm:$0xff]
    %v181 = vld [vmem:[#allocation8 + $0x48] sm:$0xff]
    %v182 = vld [vmem:[#allocation8 + $0x50] sm:$0xff]
    %v183 = vld [vmem:[#allocation8 + $0x58] sm:$0xff]
    %v184 = vld [vmem:[#allocation8 + $0x60] sm:$0xff]
    %v185 = vld [vmem:[#allocation8 + $0x68] sm:$0xff]
    %v186 = vld [vmem:[#allocation8 + $0x70] sm:$0xff]
    %v187 = vld [vmem:[#allocation8 + $0x78] sm:$0xff]
    %v189 = vperm.slane %v91, 0
    %191 = vmatpush.msra.mxu0 %v187
    %192 = vmatpush.msra.mxu0 %v186
    %193 = vmatpush.msra.mxu0 %v185
    %194 = vmatpush.msra.mxu0 %v184
    %195 = vmatpush.msra.mxu0 %v183
    %196 = vmatpush.msra.mxu0 %v182
    %197 = vmatpush.msra.mxu0 %v181
    %198 = vmatpush.msra.mxu0 %v180
    %199 = vmatpush.msra.mxu0 %v179
    %200 = vmatpush.msra.mxu0 %v178
    %201 = vmatpush.msra.mxu0 %v177
    %202 = vmatpush.msra.mxu0 %v176
    %203 = vmatpush.msra.mxu0 %v175
    %204 = vmatpush.msra.mxu0 %v174
    %205 = vmatpush.msra.mxu0 %v173
    %206 = vmatpush.msra.mxu0 %v172
    %207 = vmatmul.f32.gmra.mxu0 %v171
    %v208 = vpop.f32.mrf.mxu0
    %v209 = vadd.f32 %v189, %v208
    %210 = vdwg.mxu0
    %v211 = vlaneseq
    %v212 = vand.u32 %v211, 127
    %vm213 = vcmp.lt.s32.totalorder %v212, 8
    %v214 = vsel %vm213, %v209, -1e+30
    %215 = vmax.xlane.f32.xlu0 %v214
    %v216 = vpop.xlane.xlu0 %215
    %v217 = vsub.f32 %v214, %v216
    %v218 = vmul.f32 %v217, 1.442695
    %v219 = vpow.pop %v218
    %220 = vadd.xlane.f32.xlu0 %v219
    %v221 = vpop.xlane.xlu0 %220
    %v222 = vlog2.pop %v221
    %v223 = vmul.f32 %v222, 0.6931472
    %v224 = vsub.f32 %v217, %v223
    %225 = vst [vmem:[#allocation10] sm:$0xff] %v224
    // Predicated region
    $region46: #{tpu_custom_call.1} parent=1 // pred_check
      _
    $region47: #{tpu_custom_call.1} parent=1 // pred_check_branch
      %227 = sbr.rel (0) target = $region49
    $region48: #{tpu_custom_call.1} parent=1 // pred_region
      %229 = vsyncadd [#allocation4], 0
      %s231 = sshll.u32 [#allocation10], 4
      %s232 = int_to_ptr.vmem [resolvable:$true] %s231
      %s233 = sshll.u32 %s7, 4
      %s234 = int_to_ptr.hbm [resolvable:$true] %s233
      %236 = dma.vmem_to_hbm [thread:$0]  %s232, 128, %s234, [#allocation4]
    $region49: #{tpu_custom_call.1} parent=1 // pred_fallthru
      _
    // Predicated region
    $region50: #{tpu_custom_call.1} parent=1 // pred_check
      _
    $region51: #{tpu_custom_call.1} parent=1 // pred_check_branch
      %238 = sbr.rel (0) target = $region53
    $region52: #{tpu_custom_call.1} parent=1 // pred_region
      %240 = dma.done [#allocation4], 128
    $region53: #{tpu_custom_call.1} parent=1 // pred_fallthru
      _
    %241 = vsyncpa [#allocation3], 1
    %242 = vsyncpa [#allocation6], 1
    %243 = vsyncpa [#allocation9], 1
    %244 = vsyncpa [#allocation4], 1

</llo_original>
